<compile_context>
chip_gen: v7x
topology: tpu7x:2x2x1
jax: 0.10.0
libtpu: 0.0.40
codegen_flags: <defaults>
</compile_context>

<pallas_src>
import functools

import jax
import jax.numpy as jnp
from jax.experimental import pallas as pl
from jax.experimental.pallas import tpu as pltpu

EPS = 1e-5
HIDDEN = 64


def _round_up(x, m):
    return ((x + m - 1) // m) * m


# --------------------------------------------------------------------------------------
# Pass 1: per-tile partial sums of y (and y*y) for the global BatchNorm statistics.
# --------------------------------------------------------------------------------------
def _stats_kernel(s_ref, a_ref, ws_ref, wa_ref, wf_ref, slab_ref, part_ref, *,
                  tile_b, batch):
    b1 = slab_ref[0:1, :]          # bs + ba   (1, 64) f32
    bf = slab_ref[1:2, :]          # bf        (1, 64) f32

    # Layer 1: relu(s @ ws + a @ wa + b1)   (bf16 MXU operands, f32 accumulation)
    h = (jnp.dot(s_ref[...].astype(jnp.bfloat16), ws_ref[...],
                 preferred_element_type=jnp.float32)
         + jnp.dot(a_ref[...].astype(jnp.bfloat16), wa_ref[...],
                   preferred_element_type=jnp.float32)
         + b1)
    x = jnp.maximum(h, 0.0)

    # Layer 2: y = x @ wf + bf
    y = jnp.dot(x.astype(jnp.bfloat16), wf_ref[...],
                preferred_element_type=jnp.float32) + bf

    # Mask rows past the true batch size (wrapper zero-pads to a multiple of tile_b).
    row = pl.program_id(0) * tile_b + jax.lax.broadcasted_iota(
        jnp.int32, (tile_b, 1), 0)
    ym = jnp.where(row < batch, y, 0.0)

    sums = jnp.sum(ym, axis=0, keepdims=True)        # (1, 64)
    sqs = jnp.sum(ym * ym, axis=0, keepdims=True)    # (1, 64)
    part_ref[0] = jnp.concatenate([sums, sqs], axis=0)


# --------------------------------------------------------------------------------------
# Pass 2: re-derive y, apply the precomputed BN scale/shift, relu, and the output layer.
# --------------------------------------------------------------------------------------
def _out_kernel(s_ref, a_ref, ws_ref, wa_ref, wf_ref, slab_ref, stats_ref, o_ref):
    b1 = slab_ref[0:1, :]
    bf = slab_ref[1:2, :]
    wo_row = slab_ref[4:5, :]      # output weight as a row (1, 64)
    bo = slab_ref[5:6, 0:1]        # output bias (1, 1)
    scale = stats_ref[0:1, :]      # gamma * rsqrt(var + eps)
    shift = stats_ref[1:2, :]      # beta - mean * scale

    h = (jnp.dot(s_ref[...].astype(jnp.bfloat16), ws_ref[...],
                 preferred_element_type=jnp.float32)
         + jnp.dot(a_ref[...].astype(jnp.bfloat16), wa_ref[...],
                   preferred_element_type=jnp.float32)
         + b1)
    x = jnp.maximum(h, 0.0)
    y = jnp.dot(x.astype(jnp.bfloat16), wf_ref[...],
                preferred_element_type=jnp.float32) + bf

    z = jnp.maximum(y * scale + shift, 0.0)

    # Output layer (N=1) as VPU multiply + lane reduction (no degenerate MXU pass).
    # TODO(synk): output is lane-width-1 (masked vst); stage into a lane-dense slab
    # only if profiling ever shows the store slot binding.
    o_ref[...] = jnp.sum(z * wo_row, axis=-1, keepdims=True) + bo


# --------------------------------------------------------------------------------------
# Wrapper
# --------------------------------------------------------------------------------------
def pack_params(params):
    """Hoisted operand packing: build once per parameter update, not per forward call."""
    slab = jnp.zeros((8, HIDDEN), jnp.float32)
    slab = slab.at[0].set((params["bs"] + params["ba"]).reshape(HIDDEN))
    slab = slab.at[1].set(params["bf"].reshape(HIDDEN))
    slab = slab.at[4].set(params["wo"].reshape(HIDDEN))
    slab = slab.at[5, 0].set(params["bo"].reshape(()))
    return {
        "ws16": params["ws"].astype(jnp.bfloat16),
        "wa16": params["wa"].astype(jnp.bfloat16),
        "wf16": params["wf"].astype(jnp.bfloat16),
        "slab": slab,
        "gamma": params["gamma"].reshape(HIDDEN).astype(jnp.float32),
        "beta": params["beta"].reshape(HIDDEN).astype(jnp.float32),
    }


def cnet_forward(s, a, packed, *, tile_b=1024):
    """s: [B, s_dim], a: [B, a_dim] -> [B, 1] float32."""
    B, s_dim = s.shape
    a_dim = a.shape[1]

    # Batch tile: multiple of 8, no larger than the (8-rounded) batch.
    tile_b = min(tile_b, _round_up(B, 8))
    tile_b = max(8, (tile_b // 8) * 8)
    Bp = _round_up(B, tile_b)
    n_tiles = Bp // tile_b
    if Bp != B:
        s = jnp.pad(s, ((0, Bp - B), (0, 0)))
        a = jnp.pad(a, ((0, Bp - B), (0, 0)))

    ws16, wa16, wf16 = packed["ws16"], packed["wa16"], packed["wf16"]
    slab = packed["slab"]

    # Per-tile blocks for s/a/out; weights & slabs use constant index maps so they
    # stay VMEM-resident across the grid (no per-step re-DMA).
    s_spec = pl.BlockSpec((tile_b, s_dim), lambda i: (i, 0))
    a_spec = pl.BlockSpec((tile_b, a_dim), lambda i: (i, 0))
    ws_spec = pl.BlockSpec((s_dim, HIDDEN), lambda i: (0, 0))
    wa_spec = pl.BlockSpec((a_dim, HIDDEN), lambda i: (0, 0))
    wf_spec = pl.BlockSpec((HIDDEN, HIDDEN), lambda i: (0, 0))
    slab_spec = pl.BlockSpec((8, HIDDEN), lambda i: (0, 0))

    cparams = pltpu.CompilerParams(dimension_semantics=("parallel",))
    # No vmem_limit_bytes: per-step footprint (~tile_b KB + ~20 KB of weights) is far
    # below the 32 MiB scoped default on v5e/v6e/v7x.

    mm_flops = 2 * Bp * HIDDEN * (s_dim + a_dim + HIDDEN)
    w_bytes = 2 * ((s_dim + a_dim) * HIDDEN + HIDDEN * HIDDEN) + 4 * 8 * HIDDEN
    in_bytes = 4 * Bp * (s_dim + a_dim)

    # ---- Pass 1: per-tile partial sums for global BN statistics --------------------
    partials = pl.pallas_call(
        functools.partial(_stats_kernel, tile_b=tile_b, batch=B),
        out_shape=jax.ShapeDtypeStruct((n_tiles, 2, HIDDEN), jnp.float32),
        grid_spec=pltpu.PrefetchScalarGridSpec(
            num_scalar_prefetch=0,
            grid=(n_tiles,),
            in_specs=[s_spec, a_spec, ws_spec, wa_spec, wf_spec, slab_spec],
            out_specs=pl.BlockSpec((1, 2, HIDDEN), lambda i: (i, 0, 0)),
        ),
        compiler_params=cparams,
        cost_estimate=pl.CostEstimate(
            flops=mm_flops, transcendentals=0,
            bytes_accessed=in_bytes + w_bytes + 4 * n_tiles * 2 * HIDDEN),
    )(s, a, ws16, wa16, wf16, slab)

    # ---- Global BN statistics combine (tiny; fuses under jit) ----------------------
    totals = jnp.sum(partials, axis=0)                    # (2, 64)
    mean = totals[0] * (1.0 / B)
    var = jnp.maximum(totals[1] * (1.0 / B) - mean * mean, 0.0)   # biased variance
    scale = packed["gamma"] * jax.lax.rsqrt(var + EPS)
    shift = packed["beta"] - mean * scale
    stats = jnp.zeros((8, HIDDEN), jnp.float32).at[0].set(scale).at[1].set(shift)

    # ---- Pass 2: re-derive y, normalize, relu, output layer ------------------------
    out = pl.pallas_call(
        _out_kernel,
        out_shape=jax.ShapeDtypeStruct((Bp, 1), jnp.float32),
        grid_spec=pltpu.PrefetchScalarGridSpec(
            num_scalar_prefetch=0,
            grid=(n_tiles,),
            in_specs=[s_spec, a_spec, ws_spec, wa_spec, wf_spec, slab_spec, slab_spec],
            out_specs=pl.BlockSpec((tile_b, 1), lambda i: (i, 0)),
        ),
        compiler_params=cparams,
        cost_estimate=pl.CostEstimate(
            flops=mm_flops + 4 * Bp * HIDDEN, transcendentals=0,
            bytes_accessed=in_bytes + w_bytes + 4 * 8 * HIDDEN + 4 * Bp),
    )(s, a, ws16, wa16, wf16, slab, stats)

    return out[:B] if Bp != B else out


# --------------------------------------------------------------------------------------
# Parameter init (mimics PyTorch Linear / BatchNorm1d defaults) and pure-JAX reference.
# --------------------------------------------------------------------------------------
def init_params(key, s_dim, a_dim, hidden=HIDDEN):
    def linear(k, fan_in, fan_out):
        k1, k2 = jax.random.split(k)
        bound = 1.0 / jnp.sqrt(fan_in)
        w = jax.random.uniform(k1, (fan_in, fan_out), jnp.float32, -bound, bound)
        b = jax.random.uniform(k2, (1, fan_out), jnp.float32, -bound, bound)
        return w, b

    k1, k2, k3, k4 = jax.random.split(key, 4)
    ws, bs = linear(k1, s_dim, hidden)
    wa, ba = linear(k2, a_dim, hidden)
    wf, bf = linear(k3, hidden, hidden)
    wo, bo = linear(k4, hidden, 1)
    return {
        "ws": ws, "bs": bs, "wa": wa, "ba": ba, "wf": wf, "bf": bf,
        "gamma": jnp.ones((1, hidden), jnp.float32),
        "beta": jnp.zeros((1, hidden), jnp.float32),
        "wo": wo, "bo": bo,
    }


def cnet_reference(s, a, p):
    """Pure-JAX f32 reference mirroring the PyTorch module exactly."""
    x = jnp.maximum(s @ p["ws"] + p["bs"] + a @ p["wa"] + p["ba"], 0.0)
    y = x @ p["wf"] + p["bf"]
    mean = jnp.mean(y, axis=0, keepdims=True)
    var = jnp.mean((y - mean) ** 2, axis=0, keepdims=True)
    z = jnp.maximum((y - mean) / jnp.sqrt(var + EPS) * p["gamma"] + p["beta"], 0.0)
    return z @ p["wo"] + p["bo"]


if __name__ == "__main__":
    key = jax.random.PRNGKey(0)
    k_s, k_a, k_p = jax.random.split(key, 3)

    # Small shapes; tile_b=16 with B=60 exercises the batch grid (4 tiles) and the
    # padded-row masking in the global-BN stats pass.
    B, S_DIM, A_DIM = 60, 12, 6
    s = jax.random.normal(k_s, (B, S_DIM), jnp.float32)
    a = jax.random.normal(k_a, (B, A_DIM), jnp.float32)

    params = init_params(k_p, S_DIM, A_DIM)
    packed = pack_params(params)          # hoisted packing: once per param update

    fwd = jax.jit(lambda s_, a_: cnet_forward(s_, a_, packed, tile_b=16))
    out = jax.block_until_ready(fwd(s, a))

    ref = cnet_reference(s, a, params)
    assert out.shape == (B, 1)
    # bf16 MXU operands loosen parity vs. the f32 reference (see perf review).
    assert jnp.allclose(out, ref, atol=5e-2, rtol=5e-2)

    print("KERNEL_OK")
</pallas_src>

<mosaic_0001>
module attributes {stable_mosaic.version = 11 : i64} {
  func.func @_stats_kernel(%arg0: i32, %arg1: memref<16x12xf32, #tpu.memory_space<vmem>>, %arg2: memref<16x6xf32, #tpu.memory_space<vmem>>, %arg3: memref<12x64xbf16, #tpu.memory_space<vmem>>, %arg4: memref<6x64xbf16, #tpu.memory_space<vmem>>, %arg5: memref<64x64xbf16, #tpu.memory_space<vmem>>, %arg6: memref<8x64xf32, #tpu.memory_space<vmem>>, %arg7: memref<1x2x64xf32, #tpu.memory_space<vmem>>) attributes {dimension_semantics = [#tpu.dimension_semantics<parallel>], iteration_bounds = array<i64: 4>, scalar_prefetch = 0 : i64, scratch_operands = 0 : i64, tpu.core_type = #tpu.core_type<tc>, window_params = [{transform_indices = @transform_0, window_bounds = array<i64: 16, 12>}, {transform_indices = @transform_1, window_bounds = array<i64: 16, 6>}, {pipeline_mode = #tpu.pipeline_mode<synchronous>, transform_indices = @transform_2, window_bounds = array<i64: 12, 64>}, {pipeline_mode = #tpu.pipeline_mode<synchronous>, transform_indices = @transform_3, window_bounds = array<i64: 6, 64>}, {pipeline_mode = #tpu.pipeline_mode<synchronous>, transform_indices = @transform_4, window_bounds = array<i64: 64, 64>}, {pipeline_mode = #tpu.pipeline_mode<synchronous>, transform_indices = @transform_5, window_bounds = array<i64: 8, 64>}, {transform_indices = @transform_6, window_bounds = array<i64: 1, 2, 64>}]} {
    %c0 = arith.constant 0 : index
    %c0_0 = arith.constant 0 : index
    %0 = vector.load %arg6[%c0, %c0_0] : memref<8x64xf32, #tpu.memory_space<vmem>>, vector<1x64xf32>
    %c1 = arith.constant 1 : index
    %c0_1 = arith.constant 0 : index
    %1 = vector.load %arg6[%c1, %c0_1] : memref<8x64xf32, #tpu.memory_space<vmem>>, vector<1x64xf32>
    %c0_2 = arith.constant 0 : index
    %c0_3 = arith.constant 0 : index
    %2 = vector.load %arg1[%c0_2, %c0_3] : memref<16x12xf32, #tpu.memory_space<vmem>>, vector<16x12xf32>
    %3 = arith.truncf %2 : vector<16x12xf32> to vector<16x12xbf16>
    %c0_4 = arith.constant 0 : index
    %c0_5 = arith.constant 0 : index
    %4 = vector.load %arg3[%c0_4, %c0_5] : memref<12x64xbf16, #tpu.memory_space<vmem>>, vector<12x64xbf16>
    %cst = arith.constant dense<0.000000e+00> : vector<16x64xf32>
    %5 = tpu.matmul %3, %4, %cst {dimension_numbers = #tpu.dot_dimension_numbers<[1], [0], [0], [1], [0, 0, 1, 1], [], []>} : vector<16x12xbf16>, vector<12x64xbf16>, vector<16x64xf32> -> vector<16x64xf32>
    %c0_6 = arith.constant 0 : index
    %c0_7 = arith.constant 0 : index
    %6 = vector.load %arg2[%c0_6, %c0_7] : memref<16x6xf32, #tpu.memory_space<vmem>>, vector<16x6xf32>
    %7 = arith.truncf %6 : vector<16x6xf32> to vector<16x6xbf16>
    %c0_8 = arith.constant 0 : index
    %c0_9 = arith.constant 0 : index
    %8 = vector.load %arg4[%c0_8, %c0_9] : memref<6x64xbf16, #tpu.memory_space<vmem>>, vector<6x64xbf16>
    %cst_10 = arith.constant dense<0.000000e+00> : vector<16x64xf32>
    %9 = tpu.matmul %7, %8, %cst_10 {dimension_numbers = #tpu.dot_dimension_numbers<[1], [0], [0], [1], [0, 0, 1, 1], [], []>} : vector<16x6xbf16>, vector<6x64xbf16>, vector<16x64xf32> -> vector<16x64xf32>
    %10 = arith.addf %5, %9 : vector<16x64xf32>
    %11 = vector.broadcast %0 : vector<1x64xf32> to vector<16x64xf32>
    %12 = arith.addf %10, %11 : vector<16x64xf32>
    %cst_11 = arith.constant 0.000000e+00 : f32
    %13 = vector.broadcast %cst_11 : f32 to vector<16x64xf32>
    %14 = arith.maximumf %12, %13 : vector<16x64xf32>
    %15 = arith.truncf %14 : vector<16x64xf32> to vector<16x64xbf16>
    %c0_12 = arith.constant 0 : index
    %c0_13 = arith.constant 0 : index
    %16 = vector.load %arg5[%c0_12, %c0_13] : memref<64x64xbf16, #tpu.memory_space<vmem>>, vector<64x64xbf16>
    %cst_14 = arith.constant dense<0.000000e+00> : vector<16x64xf32>
    %17 = tpu.matmul %15, %16, %cst_14 {dimension_numbers = #tpu.dot_dimension_numbers<[1], [0], [0], [1], [0, 0, 1, 1], [], []>} : vector<16x64xbf16>, vector<64x64xbf16>, vector<16x64xf32> -> vector<16x64xf32>
    %18 = vector.broadcast %1 : vector<1x64xf32> to vector<16x64xf32>
    %19 = arith.addf %17, %18 : vector<16x64xf32>
    %c16_i32 = arith.constant 16 : i32
    %20 = arith.muli %arg0, %c16_i32 : i32
    %21 = tpu.iota {dimensions = array<i32: 0>} : vector<16x1xi32>
    %22 = vector.broadcast %20 : i32 to vector<16x1xi32>
    %23 = arith.addi %22, %21 : vector<16x1xi32>
    %c60_i32 = arith.constant 60 : i32
    %24 = vector.broadcast %c60_i32 : i32 to vector<16x1xi32>
    %25 = arith.cmpi slt, %23, %24 : vector<16x1xi32>
    %cst_15 = arith.constant 0.000000e+00 : f32
    %26 = vector.shape_cast %25 : vector<16x1xi1> to vector<16x1xi1>
    %27 = vector.broadcast %26 : vector<16x1xi1> to vector<16x64xi1>
    %28 = vector.broadcast %cst_15 : f32 to vector<16x64xf32>
    %29 = arith.select %27, %19, %28 : vector<16x64xi1>, vector<16x64xf32>
    %cst_16 = arith.constant dense<0.000000e+00> : vector<64xf32>
    %30 = vector.multi_reduction <add>, %29, %cst_16 [0] : vector<16x64xf32> to vector<64xf32>
    %31 = vector.shape_cast %30 : vector<64xf32> to vector<1x64xf32>
    %32 = arith.mulf %29, %29 : vector<16x64xf32>
    %cst_17 = arith.constant dense<0.000000e+00> : vector<64xf32>
    %33 = vector.multi_reduction <add>, %32, %cst_17 [0] : vector<16x64xf32> to vector<64xf32>
    %34 = vector.shape_cast %33 : vector<64xf32> to vector<1x64xf32>
    %35 = tpu.concatenate %31, %34 in 0 : vector<1x64xf32>, vector<1x64xf32> -> vector<2x64xf32>
    %c0_18 = arith.constant 0 : index
    %c0_19 = arith.constant 0 : index
    %c0_20 = arith.constant 0 : index
    %36 = vector.load %arg7[%c0_18, %c0_19, %c0_20] : memref<1x2x64xf32, #tpu.memory_space<vmem>>, vector<1x2x64xf32>
    %37 = vector.shape_cast %36 : vector<1x2x64xf32> to vector<2x64xf32>
    %38 = vector.shape_cast %35 : vector<2x64xf32> to vector<1x2x64xf32>
    tpu.vector_store %arg7[%c0_18, %c0_19, %c0_20], %38 {strides = array<i32>} : memref<1x2x64xf32, #tpu.memory_space<vmem>>, vector<1x2x64xf32>,
    return
  }
  func.func @transform_0(%arg0: i32) -> (i32, i32) {
    %c0_i32 = arith.constant 0 : i32
    %c0_i32_0 = arith.constant 0 : i32
    return %arg0, %c0_i32 : i32, i32
  }
  func.func @transform_1(%arg0: i32) -> (i32, i32) {
    %c0_i32 = arith.constant 0 : i32
    %c0_i32_0 = arith.constant 0 : i32
    return %arg0, %c0_i32 : i32, i32
  }
  func.func @transform_2(%arg0: i32) -> (i32, i32) {
    %c0_i32 = arith.constant 0 : i32
    %c0_i32_0 = arith.constant 0 : i32
    %c0_i32_1 = arith.constant 0 : i32
    return %c0_i32, %c0_i32_0 : i32, i32
  }
  func.func @transform_3(%arg0: i32) -> (i32, i32) {
    %c0_i32 = arith.constant 0 : i32
    %c0_i32_0 = arith.constant 0 : i32
    %c0_i32_1 = arith.constant 0 : i32
    return %c0_i32, %c0_i32_0 : i32, i32
  }
  func.func @transform_4(%arg0: i32) -> (i32, i32) {
    %c0_i32 = arith.constant 0 : i32
    %c0_i32_0 = arith.constant 0 : i32
    %c0_i32_1 = arith.constant 0 : i32
    return %c0_i32, %c0_i32_0 : i32, i32
  }
  func.func @transform_5(%arg0: i32) -> (i32, i32) {
    %c0_i32 = arith.constant 0 : i32
    %c0_i32_0 = arith.constant 0 : i32
    %c0_i32_1 = arith.constant 0 : i32
    return %c0_i32, %c0_i32_0 : i32, i32
  }
  func.func @transform_6(%arg0: i32) -> (i32, i32, i32) {
    %c0_i32 = arith.constant 0 : i32
    %c0_i32_0 = arith.constant 0 : i32
    %c0_i32_1 = arith.constant 0 : i32
    return %arg0, %c0_i32, %c0_i32_0 : i32, i32, i32
  }
}

module attributes {stable_mosaic.version = 11 : i64} {
  func.func @_out_kernel(%arg0: i32, %arg1: memref<16x12xf32, #tpu.memory_space<vmem>>, %arg2: memref<16x6xf32, #tpu.memory_space<vmem>>, %arg3: memref<12x64xbf16, #tpu.memory_space<vmem>>, %arg4: memref<6x64xbf16, #tpu.memory_space<vmem>>, %arg5: memref<64x64xbf16, #tpu.memory_space<vmem>>, %arg6: memref<8x64xf32, #tpu.memory_space<vmem>>, %arg7: memref<8x64xf32, #tpu.memory_space<vmem>>, %arg8: memref<16x1xf32, #tpu.memory_space<vmem>>) attributes {dimension_semantics = [#tpu.dimension_semantics<parallel>], iteration_bounds = array<i64: 4>, scalar_prefetch = 0 : i64, scratch_operands = 0 : i64, tpu.core_type = #tpu.core_type<tc>, window_params = [{transform_indices = @transform_0, window_bounds = array<i64: 16, 12>}, {transform_indices = @transform_1, window_bounds = array<i64: 16, 6>}, {pipeline_mode = #tpu.pipeline_mode<synchronous>, transform_indices = @transform_2, window_bounds = array<i64: 12, 64>}, {pipeline_mode = #tpu.pipeline_mode<synchronous>, transform_indices = @transform_3, window_bounds = array<i64: 6, 64>}, {pipeline_mode = #tpu.pipeline_mode<synchronous>, transform_indices = @transform_4, window_bounds = array<i64: 64, 64>}, {pipeline_mode = #tpu.pipeline_mode<synchronous>, transform_indices = @transform_5, window_bounds = array<i64: 8, 64>}, {pipeline_mode = #tpu.pipeline_mode<synchronous>, transform_indices = @transform_6, window_bounds = array<i64: 8, 64>}, {transform_indices = @transform_7, window_bounds = array<i64: 16, 1>}]} {
    %c0 = arith.constant 0 : index
    %c0_0 = arith.constant 0 : index
    %0 = vector.load %arg6[%c0, %c0_0] : memref<8x64xf32, #tpu.memory_space<vmem>>, vector<1x64xf32>
    %c1 = arith.constant 1 : index
    %c0_1 = arith.constant 0 : index
    %1 = vector.load %arg6[%c1, %c0_1] : memref<8x64xf32, #tpu.memory_space<vmem>>, vector<1x64xf32>
    %c4 = arith.constant 4 : index
    %c0_2 = arith.constant 0 : index
    %2 = vector.load %arg6[%c4, %c0_2] : memref<8x64xf32, #tpu.memory_space<vmem>>, vector<1x64xf32>
    %c5 = arith.constant 5 : index
    %c0_3 = arith.constant 0 : index
    %3 = vector.load %arg6[%c5, %c0_3] : memref<8x64xf32, #tpu.memory_space<vmem>>, vector<1x1xf32>
    %c0_4 = arith.constant 0 : index
    %c0_5 = arith.constant 0 : index
    %4 = vector.load %arg7[%c0_4, %c0_5] : memref<8x64xf32, #tpu.memory_space<vmem>>, vector<1x64xf32>
    %c1_6 = arith.constant 1 : index
    %c0_7 = arith.constant 0 : index
    %5 = vector.load %arg7[%c1_6, %c0_7] : memref<8x64xf32, #tpu.memory_space<vmem>>, vector<1x64xf32>
    %c0_8 = arith.constant 0 : index
    %c0_9 = arith.constant 0 : index
    %6 = vector.load %arg1[%c0_8, %c0_9] : memref<16x12xf32, #tpu.memory_space<vmem>>, vector<16x12xf32>
    %7 = arith.truncf %6 : vector<16x12xf32> to vector<16x12xbf16>
    %c0_10 = arith.constant 0 : index
    %c0_11 = arith.constant 0 : index
    %8 = vector.load %arg3[%c0_10, %c0_11] : memref<12x64xbf16, #tpu.memory_space<vmem>>, vector<12x64xbf16>
    %cst = arith.constant dense<0.000000e+00> : vector<16x64xf32>
    %9 = tpu.matmul %7, %8, %cst {dimension_numbers = #tpu.dot_dimension_numbers<[1], [0], [0], [1], [0, 0, 1, 1], [], []>} : vector<16x12xbf16>, vector<12x64xbf16>, vector<16x64xf32> -> vector<16x64xf32>
    %c0_12 = arith.constant 0 : index
    %c0_13 = arith.constant 0 : index
    %10 = vector.load %arg2[%c0_12, %c0_13] : memref<16x6xf32, #tpu.memory_space<vmem>>, vector<16x6xf32>
    %11 = arith.truncf %10 : vector<16x6xf32> to vector<16x6xbf16>
    %c0_14 = arith.constant 0 : index
    %c0_15 = arith.constant 0 : index
    %12 = vector.load %arg4[%c0_14, %c0_15] : memref<6x64xbf16, #tpu.memory_space<vmem>>, vector<6x64xbf16>
    %cst_16 = arith.constant dense<0.000000e+00> : vector<16x64xf32>
    %13 = tpu.matmul %11, %12, %cst_16 {dimension_numbers = #tpu.dot_dimension_numbers<[1], [0], [0], [1], [0, 0, 1, 1], [], []>} : vector<16x6xbf16>, vector<6x64xbf16>, vector<16x64xf32> -> vector<16x64xf32>
    %14 = arith.addf %9, %13 : vector<16x64xf32>
    %15 = vector.broadcast %0 : vector<1x64xf32> to vector<16x64xf32>
    %16 = arith.addf %14, %15 : vector<16x64xf32>
    %cst_17 = arith.constant 0.000000e+00 : f32
    %17 = vector.broadcast %cst_17 : f32 to vector<16x64xf32>
    %18 = arith.maximumf %16, %17 : vector<16x64xf32>
    %19 = arith.truncf %18 : vector<16x64xf32> to vector<16x64xbf16>
    %c0_18 = arith.constant 0 : index
    %c0_19 = arith.constant 0 : index
    %20 = vector.load %arg5[%c0_18, %c0_19] : memref<64x64xbf16, #tpu.memory_space<vmem>>, vector<64x64xbf16>
    %cst_20 = arith.constant dense<0.000000e+00> : vector<16x64xf32>
    %21 = tpu.matmul %19, %20, %cst_20 {dimension_numbers = #tpu.dot_dimension_numbers<[1], [0], [0], [1], [0, 0, 1, 1], [], []>} : vector<16x64xbf16>, vector<64x64xbf16>, vector<16x64xf32> -> vector<16x64xf32>
    %22 = vector.broadcast %1 : vector<1x64xf32> to vector<16x64xf32>
    %23 = arith.addf %21, %22 : vector<16x64xf32>
    %24 = vector.broadcast %4 : vector<1x64xf32> to vector<16x64xf32>
    %25 = arith.mulf %23, %24 : vector<16x64xf32>
    %26 = vector.broadcast %5 : vector<1x64xf32> to vector<16x64xf32>
    %27 = arith.addf %25, %26 : vector<16x64xf32>
    %cst_21 = arith.constant 0.000000e+00 : f32
    %28 = vector.broadcast %cst_21 : f32 to vector<16x64xf32>
    %29 = arith.maximumf %27, %28 : vector<16x64xf32>
    %30 = vector.broadcast %2 : vector<1x64xf32> to vector<16x64xf32>
    %31 = arith.mulf %29, %30 : vector<16x64xf32>
    %cst_22 = arith.constant dense<0.000000e+00> : vector<16xf32>
    %32 = vector.multi_reduction <add>, %31, %cst_22 [1] : vector<16x64xf32> to vector<16xf32>
    %33 = vector.shape_cast %32 : vector<16xf32> to vector<16x1xf32>
    %34 = vector.broadcast %3 : vector<1x1xf32> to vector<16x1xf32>
    %35 = arith.addf %33, %34 : vector<16x1xf32>
    %c0_23 = arith.constant 0 : index
    %c0_24 = arith.constant 0 : index
    %36 = vector.load %arg8[%c0_23, %c0_24] : memref<16x1xf32, #tpu.memory_space<vmem>>, vector<16x1xf32>
    tpu.vector_store %arg8[%c0_23, %c0_24], %35 {strides = array<i32>} : memref<16x1xf32, #tpu.memory_space<vmem>>, vector<16x1xf32>,
    return
  }
  func.func @transform_0(%arg0: i32) -> (i32, i32) {
    %c0_i32 = arith.constant 0 : i32
    %c0_i32_0 = arith.constant 0 : i32
    return %arg0, %c0_i32 : i32, i32
  }
  func.func @transform_1(%arg0: i32) -> (i32, i32) {
    %c0_i32 = arith.constant 0 : i32
    %c0_i32_0 = arith.constant 0 : i32
    return %arg0, %c0_i32 : i32, i32
  }
  func.func @transform_2(%arg0: i32) -> (i32, i32) {
    %c0_i32 = arith.constant 0 : i32
    %c0_i32_0 = arith.constant 0 : i32
    %c0_i32_1 = arith.constant 0 : i32
    return %c0_i32, %c0_i32_0 : i32, i32
  }
  func.func @transform_3(%arg0: i32) -> (i32, i32) {
    %c0_i32 = arith.constant 0 : i32
    %c0_i32_0 = arith.constant 0 : i32
    %c0_i32_1 = arith.constant 0 : i32
    return %c0_i32, %c0_i32_0 : i32, i32
  }
  func.func @transform_4(%arg0: i32) -> (i32, i32) {
    %c0_i32 = arith.constant 0 : i32
    %c0_i32_0 = arith.constant 0 : i32
    %c0_i32_1 = arith.constant 0 : i32
    return %c0_i32, %c0_i32_0 : i32, i32
  }
  func.func @transform_5(%arg0: i32) -> (i32, i32) {
    %c0_i32 = arith.constant 0 : i32
    %c0_i32_0 = arith.constant 0 : i32
    %c0_i32_1 = arith.constant 0 : i32
    return %c0_i32, %c0_i32_0 : i32, i32
  }
  func.func @transform_6(%arg0: i32) -> (i32, i32) {
    %c0_i32 = arith.constant 0 : i32
    %c0_i32_0 = arith.constant 0 : i32
    %c0_i32_1 = arith.constant 0 : i32
    return %c0_i32, %c0_i32_0 : i32, i32
  }
  func.func @transform_7(%arg0: i32) -> (i32, i32) {
    %c0_i32 = arith.constant 0 : i32
    %c0_i32_0 = arith.constant 0 : i32
    return %arg0, %c0_i32 : i32, i32
  }
}

</mosaic_0001>

<llo_original>
// kernel: _lambda_.3
$region0: #{_lambda_.3}
  #allocation0 [shape = 'u32[]', space=smem, size = 0x4, offset = 0x4, fixed_abs, tag = 'smem constant byte address 0x4 - core index']
  #allocation1 [shape = 'u32[144,128]{1,0:T(1,128)}', space=vmem, size = 0x12000, scoped, tag = 'internal scratch']
  %s0 = inlined_call_operand.vmem [shape: f32[64,12], index: 0, kind: input, shape index: {}]
  %s1 = inlined_call_operand.vmem [shape: f32[64,6], index: 1, kind: input, shape index: {}]
  %s2 = inlined_call_operand.vmem [shape: bf16[12,64], index: 2, kind: input, shape index: {}]
  %s3 = inlined_call_operand.vmem [shape: bf16[6,64], index: 3, kind: input, shape index: {}]
  %s4 = inlined_call_operand.vmem [shape: bf16[64,64], index: 4, kind: input, shape index: {}]
  %s5 = inlined_call_operand.vmem [shape: f32[8,64], index: 5, kind: input, shape index: {}]
  %s6 = inlined_call_operand.vmem [shape: f32[8,64], index: 6, kind: input, shape index: {}]
  %s7 = inlined_call_operand.vmem [shape: f32[64,1], index: 7, kind: output, shape index: {}]
  %s8 = sld [smem:[#allocation0]]
  $region61: #{_lambda_.3} parent=0
    _
  %s10 = ssub.s32 1, %s8
  %s11 = scalar_select 0, %s10, %s8
  loop: start=0, step=1, limit=6
  $region2: #{_lambda_.3} parent=0 // loop_pre_header
    _
  $region3: #{_lambda_.3} parent=0 // loop_header
    %s13 = sphi 0, %s17
    %p14 = scmp.ge.s32.totalorder %s13, 6
    %s23 = sphi 0, %s25
    %s26 = sphi 0, %s23
    %s27 = sphi 0, %s26
    %s43 = sphi 0, %s27
    %s49 = sphi 0, %s51
    %s52 = sphi 0, %s49
    %s53 = sphi 0, %s52
    %s69 = sphi 0, %s53
    %s73 = sphi 0, %s73
    %s75 = sphi 0, %s73
    %s76 = sphi 0, %s75
    %s90 = sphi 0, %s76
    %s94 = sphi 0, %s94
    %s96 = sphi 0, %s94
    %s97 = sphi 0, %s96
    %s111 = sphi 0, %s97
    %s115 = sphi 0, %s115
    %s117 = sphi 0, %s115
    %s118 = sphi 0, %s117
    %s132 = sphi 0, %s118
    %s136 = sphi 0, %s136
    %s138 = sphi 0, %s136
    %s139 = sphi 0, %s138
    %s153 = sphi 0, %s139
    %s157 = sphi 0, %s157
    %s159 = sphi 0, %s157
    %s160 = sphi 0, %s159
    %s174 = sphi 0, %s160
    %s180 = sphi 0, %s182
    %s183 = sphi 0, %s180
    %s184 = sphi 0, %s183
    %s200 = sphi 0, %s184
  $region4: #{_lambda_.3} parent=0 // loop_header_branch
    %16 = sbr.rel (%p14) target = $region8
  $region5: #{_lambda_.3} parent=0 // loop_body
    %s18 = ssub.s32 %s13, 1
    %s19 = ssub.s32 %s13, 2
    %s20 = sadd.s32 %s13, 1
    %s21 = ssub.s32 %s13, %s20
    %p22 = scmp.eq.s32.totalorder %s21, 0
    %s24 = sadd.s32 %s23, 1
    %s25 = scalar_select %p22, %s23, %s24
    %p28 = pneg %p22
    %p29 = scmp.eq.s32.totalorder %s13, 3
    %p30 = por %p28, %p29
    %p31 = scmp.ne.s32.totalorder %s23, %s26
    %p32 = scmp.eq.s32.totalorder %s13, 0
    %p33 = por %p31, %p32
    %p34 = scmp.ne.s32.totalorder %s23, %s26
    %p35 = scmp.eq.s32.totalorder %s18, 3
    %p36 = por %p34, %p35
    %p37 = scmp.ne.s32.totalorder %s26, %s27
    %p38 = scmp.eq.s32.totalorder %s18, 0
    %p39 = por %p37, %p38
    %p40 = scmp.ne.s32.totalorder %s26, %s27
    %p41 = scmp.eq.s32.totalorder %s19, 3
    %p42 = por %p40, %p41
    %p44 = scmp.ne.s32.totalorder %s27, %s43
    %p45 = scmp.eq.s32.totalorder %s19, 0
    %p46 = por %p44, %p45
    %s47 = ssub.s32 %s13, %s20
    %p48 = scmp.eq.s32.totalorder %s47, 0
    %s50 = sadd.s32 %s49, 1
    %s51 = scalar_select %p48, %s49, %s50
    %p54 = pneg %p48
    %p55 = scmp.eq.s32.totalorder %s13, 3
    %p56 = por %p54, %p55
    %p57 = scmp.ne.s32.totalorder %s49, %s52
    %p58 = scmp.eq.s32.totalorder %s13, 0
    %p59 = por %p57, %p58
    %p60 = scmp.ne.s32.totalorder %s49, %s52
    %p61 = scmp.eq.s32.totalorder %s18, 3
    %p62 = por %p60, %p61
    %p63 = scmp.ne.s32.totalorder %s52, %s53
    %p64 = scmp.eq.s32.totalorder %s18, 0
    %p65 = por %p63, %p64
    %p66 = scmp.ne.s32.totalorder %s52, %s53
    %p67 = scmp.eq.s32.totalorder %s19, 3
    %p68 = por %p66, %p67
    %p70 = scmp.ne.s32.totalorder %s53, %s69
    %p71 = scmp.eq.s32.totalorder %s19, 0
    %p72 = por %p70, %p71
    %s74 = sadd.s32 %s73, 1
    %p77 = scmp.eq.s32.totalorder %s13, 3
    %p78 = scmp.ne.s32.totalorder %s73, %s75
    %p79 = scmp.eq.s32.totalorder %s13, 0
    %p80 = por %p78, %p79
    %p81 = scmp.ne.s32.totalorder %s73, %s75
    %p82 = scmp.eq.s32.totalorder %s18, 3
    %p83 = por %p81, %p82
    %p84 = scmp.ne.s32.totalorder %s75, %s76
    %p85 = scmp.eq.s32.totalorder %s18, 0
    %p86 = por %p84, %p85
    %p87 = scmp.ne.s32.totalorder %s75, %s76
    %p88 = scmp.eq.s32.totalorder %s19, 3
    %p89 = por %p87, %p88
    %p91 = scmp.ne.s32.totalorder %s76, %s90
    %p92 = scmp.eq.s32.totalorder %s19, 0
    %p93 = por %p91, %p92
    %s95 = sadd.s32 %s94, 1
    %p98 = scmp.eq.s32.totalorder %s13, 3
    %p99 = scmp.ne.s32.totalorder %s94, %s96
    %p100 = scmp.eq.s32.totalorder %s13, 0
    %p101 = por %p99, %p100
    %p102 = scmp.ne.s32.totalorder %s94, %s96
    %p103 = scmp.eq.s32.totalorder %s18, 3
    %p104 = por %p102, %p103
    %p105 = scmp.ne.s32.totalorder %s96, %s97
    %p106 = scmp.eq.s32.totalorder %s18, 0
    %p107 = por %p105, %p106
    %p108 = scmp.ne.s32.totalorder %s96, %s97
    %p109 = scmp.eq.s32.totalorder %s19, 3
    %p110 = por %p108, %p109
    %p112 = scmp.ne.s32.totalorder %s97, %s111
    %p113 = scmp.eq.s32.totalorder %s19, 0
    %p114 = por %p112, %p113
    %s116 = sadd.s32 %s115, 1
    %p119 = scmp.eq.s32.totalorder %s13, 3
    %p120 = scmp.ne.s32.totalorder %s115, %s117
    %p121 = scmp.eq.s32.totalorder %s13, 0
    %p122 = por %p120, %p121
    %p123 = scmp.ne.s32.totalorder %s115, %s117
    %p124 = scmp.eq.s32.totalorder %s18, 3
    %p125 = por %p123, %p124
    %p126 = scmp.ne.s32.totalorder %s117, %s118
    %p127 = scmp.eq.s32.totalorder %s18, 0
    %p128 = por %p126, %p127
    %p129 = scmp.ne.s32.totalorder %s117, %s118
    %p130 = scmp.eq.s32.totalorder %s19, 3
    %p131 = por %p129, %p130
    %p133 = scmp.ne.s32.totalorder %s118, %s132
    %p134 = scmp.eq.s32.totalorder %s19, 0
    %p135 = por %p133, %p134
    %s137 = sadd.s32 %s136, 1
    %p140 = scmp.eq.s32.totalorder %s13, 3
    %p141 = scmp.ne.s32.totalorder %s136, %s138
    %p142 = scmp.eq.s32.totalorder %s13, 0
    %p143 = por %p141, %p142
    %p144 = scmp.ne.s32.totalorder %s136, %s138
    %p145 = scmp.eq.s32.totalorder %s18, 3
    %p146 = por %p144, %p145
    %p147 = scmp.ne.s32.totalorder %s138, %s139
    %p148 = scmp.eq.s32.totalorder %s18, 0
    %p149 = por %p147, %p148
    %p150 = scmp.ne.s32.totalorder %s138, %s139
    %p151 = scmp.eq.s32.totalorder %s19, 3
    %p152 = por %p150, %p151
    %p154 = scmp.ne.s32.totalorder %s139, %s153
    %p155 = scmp.eq.s32.totalorder %s19, 0
    %p156 = por %p154, %p155
    %s158 = sadd.s32 %s157, 1
    %p161 = scmp.eq.s32.totalorder %s13, 3
    %p162 = scmp.ne.s32.totalorder %s157, %s159
    %p163 = scmp.eq.s32.totalorder %s13, 0
    %p164 = por %p162, %p163
    %p165 = scmp.ne.s32.totalorder %s157, %s159
    %p166 = scmp.eq.s32.totalorder %s18, 3
    %p167 = por %p165, %p166
    %p168 = scmp.ne.s32.totalorder %s159, %s160
    %p169 = scmp.eq.s32.totalorder %s18, 0
    %p170 = por %p168, %p169
    %p171 = scmp.ne.s32.totalorder %s159, %s160
    %p172 = scmp.eq.s32.totalorder %s19, 3
    %p173 = por %p171, %p172
    %p175 = scmp.ne.s32.totalorder %s160, %s174
    %p176 = scmp.eq.s32.totalorder %s19, 0
    %p177 = por %p175, %p176
    %s178 = ssub.s32 %s13, %s20
    %p179 = scmp.eq.s32.totalorder %s178, 0
    %s181 = sadd.s32 %s180, 1
    %s182 = scalar_select %p179, %s180, %s181
    %p185 = pneg %p179
    %p186 = scmp.eq.s32.totalorder %s13, 3
    %p187 = por %p185, %p186
    %p188 = scmp.ne.s32.totalorder %s180, %s183
    %p189 = scmp.eq.s32.totalorder %s13, 0
    %p190 = por %p188, %p189
    %p191 = scmp.ne.s32.totalorder %s180, %s183
    %p192 = scmp.eq.s32.totalorder %s18, 3
    %p193 = por %p191, %p192
    %p194 = scmp.ne.s32.totalorder %s183, %s184
    %p195 = scmp.eq.s32.totalorder %s18, 0
    %p196 = por %p194, %p195
    %p197 = scmp.ne.s32.totalorder %s183, %s184
    %p198 = scmp.eq.s32.totalorder %s19, 3
    %p199 = por %p197, %p198
    %p201 = scmp.ne.s32.totalorder %s184, %s200
    %p202 = scmp.eq.s32.totalorder %s19, 0
    %p203 = por %p201, %p202
    %p204 = scmp.le.s32.totalorder 1, %s13
    %p205 = scmp.lt.s32.totalorder %s13, 5
    %p206 = pnand %p204, %p205
    %p207 = pneg %p206
    // Predicated region
    $region9: #{_lambda_.3} parent=5 // pred_check
      _
    $region10: #{_lambda_.3} parent=5 // pred_check_branch
      %209 = sbr.rel (%p206) target = $region12
    $region11: #{_lambda_.3} parent=5 // pred_region
      %s210 = ssub.s32 %s13, 1
      // Predicated region
      $region13: #{_lambda_.3} parent=11 // pred_check
        %p211 = pneg %p86
      $region14: #{_lambda_.3} parent=11 // pred_check_branch
        %213 = sbr.rel (%p211) target = $region16
      $region15: #{_lambda_.3} parent=11 // pred_region
        _
      $region16: #{_lambda_.3} parent=11 // pred_fallthru
        _
      // Predicated region
      $region17: #{_lambda_.3} parent=11 // pred_check
        %p214 = pneg %p107
      $region18: #{_lambda_.3} parent=11 // pred_check_branch
        %216 = sbr.rel (%p214) target = $region20
      $region19: #{_lambda_.3} parent=11 // pred_region
        _
      $region20: #{_lambda_.3} parent=11 // pred_fallthru
        _
      // Predicated region
      $region21: #{_lambda_.3} parent=11 // pred_check
        %p217 = pneg %p128
      $region22: #{_lambda_.3} parent=11 // pred_check_branch
        %219 = sbr.rel (%p217) target = $region24
      $region23: #{_lambda_.3} parent=11 // pred_region
        _
      $region24: #{_lambda_.3} parent=11 // pred_fallthru
        _
      // Predicated region
      $region25: #{_lambda_.3} parent=11 // pred_check
        %p220 = pneg %p149
      $region26: #{_lambda_.3} parent=11 // pred_check_branch
        %222 = sbr.rel (%p220) target = $region28
      $region27: #{_lambda_.3} parent=11 // pred_region
        _
      $region28: #{_lambda_.3} parent=11 // pred_fallthru
        _
      // Predicated region
      $region29: #{_lambda_.3} parent=11 // pred_check
        %p223 = pneg %p170
      $region30: #{_lambda_.3} parent=11 // pred_check_branch
        %225 = sbr.rel (%p223) target = $region32
      $region31: #{_lambda_.3} parent=11 // pred_region
        _
      $region32: #{_lambda_.3} parent=11 // pred_fallthru
        _
    $region12: #{_lambda_.3} parent=5 // pred_fallthru
      _
    %p226 = scmp.lt.s32.totalorder %s13, 4
    // Predicated region
    $region33: #{_lambda_.3} parent=5 // pred_check
      %p227 = pneg %p226
    $region34: #{_lambda_.3} parent=5 // pred_check_branch
      %229 = sbr.rel (%p227) target = $region36
    $region35: #{_lambda_.3} parent=5 // pred_region
      // Predicated region
      $region37: #{_lambda_.3} parent=35 // pred_check
        %p230 = pneg %p33
      $region38: #{_lambda_.3} parent=35 // pred_check_branch
        %232 = sbr.rel (%p230) target = $region40
      $region39: #{_lambda_.3} parent=35 // pred_region
        %s233 = smul.u32 2, %s13
        %p234 = scmp.lt.s32.totalorder %s233, 7
        %s235 = scalar_select %p234, %s233, 7
        %s236 = smul.addr %s235, 8
        %s237 = scalar_lea.vmem %s0, %s236
        %s238 = smul.u32 2, %s13
      $region40: #{_lambda_.3} parent=35 // pred_fallthru
        _
      // Predicated region
      $region41: #{_lambda_.3} parent=35 // pred_check
        %p239 = pneg %p59
      $region42: #{_lambda_.3} parent=35 // pred_check_branch
        %241 = sbr.rel (%p239) target = $region44
      $region43: #{_lambda_.3} parent=35 // pred_region
        %s242 = smul.u32 2, %s13
        %p243 = scmp.lt.s32.totalorder %s242, 7
        %s244 = scalar_select %p243, %s242, 7
        %s245 = smul.addr %s244, 8
        %s246 = scalar_lea.vmem %s1, %s245
        %s247 = smul.u32 2, %s13
      $region44: #{_lambda_.3} parent=35 // pred_fallthru
        _
    $region36: #{_lambda_.3} parent=5 // pred_fallthru
      _
    %p248 = scmp.le.s32.totalorder 1, %s13
    %p249 = scmp.lt.s32.totalorder %s13, 5
    %p250 = pnand %p248, %p249
    %p251 = pneg %p250
    // Predicated region
    $region45: #{_lambda_.3} parent=5 // pred_check
      _
    $region46: #{_lambda_.3} parent=5 // pred_check_branch
      %253 = sbr.rel (%p250) target = $region48
    $region47: #{_lambda_.3} parent=5 // pred_region
      %s254 = ssub.s32 %s13, 1
      %s255 = smul.u32 2, %s18
      %p256 = scmp.lt.s32.totalorder %s255, 7
      %s257 = scalar_select %p256, %s255, 7
      %s258 = smul.addr %s257, 8
      %s259 = scalar_lea.vmem %s0, %s258
      %p260 = pneg %p39
      %p261 = pneg %p36
      %s262 = smul.u32 2, %s18
      %p263 = scmp.lt.s32.totalorder %s262, 7
      %s264 = scalar_select %p263, %s262, 7
      %s265 = smul.addr %s264, 8
      %s266 = scalar_lea.vmem %s1, %s265
      %p267 = pneg %p65
      %p268 = pneg %p62
      %p269 = pneg %p86
      %p270 = pneg %p83
      %p271 = pneg %p107
      %p272 = pneg %p104
      %p273 = pneg %p128
      %p274 = pneg %p125
      %p275 = pneg %p149
      %p276 = pneg %p146
      %p277 = pneg %p170
      %p278 = pneg %p167
      %p279 = pneg %p196
      %p280 = pneg %p193
      %s281 = smul.u32 2, %s18
      %p282 = scmp.lt.s32.totalorder %s281, 7
      %s283 = scalar_select %p282, %s281, 7
      %s284 = smul.addr %s283, 8
      %s285 = scalar_lea.vmem %s7, %s284
      %s286 = smul.u32 2, %s18
      %p287 = scmp.lt.s32.totalorder %s286, 7
      %s288 = scalar_select %p287, %s286, 7
      %s289 = smul.addr %s288, 8
      %s290 = scalar_lea.vmem %s0, %s289
      %s291 = smul.u32 2, %s18
      %s292 = smul.u32 2, %s18
      %p293 = scmp.lt.s32.totalorder %s292, 7
      %s294 = scalar_select %p293, %s292, 7
      %s295 = smul.addr %s294, 8
      %s296 = scalar_lea.vmem %s1, %s295
      %s297 = smul.u32 2, %s18
      %s298 = smul.u32 2, %s18
      %p299 = scmp.lt.s32.totalorder %s298, 7
      %s300 = scalar_select %p299, %s298, 7
      %s301 = smul.addr %s300, 8
      %s302 = scalar_lea.vmem %s7, %s301
      %s303 = smul.u32 2, %s18
      %v305 = vld [vmem:[%s5] sm:$0x1]
      %v306 = vld [vmem:[%s5 + $0x1] sm:$0x1]
      %v307 = vld [vmem:[%s5 + $0x4] sm:$0x1]
      %v308 = vld [vmem:[%s5 + $0x5] sm:$0x1]
      %v309 = vld [vmem:[%s6] sm:$0x1]
      %v310 = vld [vmem:[%s6 + $0x1] sm:$0x1]
      %v311 = vld [vmem:[%s290] sm:$0xff]
      %v312 = vld [vmem:[%s290 + $0x8] sm:$0xff]
      %v313 = vpack.c.bf16 %v312, %v311
      %v314 = vld [vmem:[%s2] sm:$0xf]
      %v315 = vld [vmem:[%s2 + $0x4] sm:$0x3]
      %v316 = vld [vmem:[%s296] sm:$0xff]
      %v317 = vld [vmem:[%s296 + $0x8] sm:$0xff]
      %v318 = vpack.c.bf16 %v317, %v316
      %v319 = vld [vmem:[%s3] sm:$0x7]
      %vm320 = vcmask 48128
      %v322 = vsel %vm320, %v318, 0
      %vm324 = vcmask 1042432
      %v326 = vsel %vm324, %v319, 0
      %328 = vmatprep.subr.bf16.mxu0 0
      %329 = vmatpush1.bf16.msra.mxu0 %v326
      %330 = vmatprep.subr.bf16.mxu0 0
      %331 = vmatpush1.bf16.msra.mxu0 0
      %332 = vmatprep.subr.bf16.mxu0 0
      %333 = vmatpush1.bf16.msra.mxu0 0
      %334 = vmatprep.subr.bf16.mxu0 0
      %335 = vmatpush1.bf16.msra.mxu0 0
      %336 = vmatprep.subr.bf16.mxu0 0
      %337 = vmatpush1.bf16.msra.mxu0 0
      %338 = vmatprep.subr.bf16.mxu0 0
      %339 = vmatpush1.bf16.msra.mxu0 0
      %340 = vmatprep.subr.bf16.mxu0 0
      %341 = vmatpush1.bf16.msra.mxu0 0
      %342 = vmatprep.subr.bf16.mxu0 0
      %343 = vmatpush1.bf16.msra.mxu0 0
      %344 = vmatprep.subr.bf16.mxu0 0
      %345 = vmatpush1.bf16.msra.mxu0 0
      %346 = vmatprep.subr.bf16.mxu0 0
      %347 = vmatpush1.bf16.msra.mxu0 0
      %348 = vmatprep.subr.bf16.mxu0 0
      %349 = vmatpush1.bf16.msra.mxu0 0
      %350 = vmatprep.subr.bf16.mxu0 0
      %351 = vmatpush1.bf16.msra.mxu0 0
      %352 = vmatprep.subr.bf16.mxu0 0
      %353 = vmatpush1.bf16.msra.mxu0 0
      %354 = vmatprep.subr.bf16.mxu0 0
      %355 = vmatpush1.bf16.msra.mxu0 0
      %356 = vmatprep.subr.bf16.mxu0 0
      %357 = vmatpush1.bf16.msra.mxu0 0
      %358 = vmatprep.subr.bf16.mxu0 0
      %359 = vmatpush1.bf16.msra.mxu0 0
      %360 = vmatprep.mubr.bf16.mxu0 0
      %361 = vmatmul.mubr.bf16.gmra.mrb[0].mxu0 %v322
      %v362 = vpop.f32.mrb[0].mxu0
      %v363 = vadd.f32 0.0, %v362
      %v364 = vpop.f32.mrb[0].mxu0
      %v365 = vpop.f32.mrb[0].mxu0
      %v366 = vadd.f32 0.0, %v365
      %v367 = vpop.f32.mrb[0].mxu0
      %368 = vdwg.mxu0
      %v371 = vunpack.c.l.b16 %v314
      %v372 = vunpack.c.l.b16 %v315
      %v373 = vpack.c.b16 %v372, %v371
      %vm374 = vcmask 97280
      %v376 = vsel %vm374, %v313, 0
      %vm378 = vcmask 1045504
      %v380 = vsel %vm378, %v373, 0
      %382 = vmatprep.subr.bf16.mxu0 0
      %383 = vmatpush1.bf16.msra.mxu0 %v380
      %384 = vmatprep.subr.bf16.mxu0 0
      %385 = vmatpush1.bf16.msra.mxu0 0
      %386 = vmatprep.subr.bf16.mxu0 0
      %387 = vmatpush1.bf16.msra.mxu0 0
      %388 = vmatprep.subr.bf16.mxu0 0
      %389 = vmatpush1.bf16.msra.mxu0 0
      %390 = vmatprep.subr.bf16.mxu0 0
      %391 = vmatpush1.bf16.msra.mxu0 0
      %392 = vmatprep.subr.bf16.mxu0 0
      %393 = vmatpush1.bf16.msra.mxu0 0
      %394 = vmatprep.subr.bf16.mxu0 0
      %395 = vmatpush1.bf16.msra.mxu0 0
      %396 = vmatprep.subr.bf16.mxu0 0
      %397 = vmatpush1.bf16.msra.mxu0 0
      %398 = vmatprep.subr.bf16.mxu0 0
      %399 = vmatpush1.bf16.msra.mxu0 0
      %400 = vmatprep.subr.bf16.mxu0 0
      %401 = vmatpush1.bf16.msra.mxu0 0
      %402 = vmatprep.subr.bf16.mxu0 0
      %403 = vmatpush1.bf16.msra.mxu0 0
      %404 = vmatprep.subr.bf16.mxu0 0
      %405 = vmatpush1.bf16.msra.mxu0 0
      %406 = vmatprep.subr.bf16.mxu0 0
      %407 = vmatpush1.bf16.msra.mxu0 0
      %408 = vmatprep.subr.bf16.mxu0 0
      %409 = vmatpush1.bf16.msra.mxu0 0
      %410 = vmatprep.subr.bf16.mxu0 0
      %411 = vmatpush1.bf16.msra.mxu0 0
      %412 = vmatprep.subr.bf16.mxu0 0
      %413 = vmatpush1.bf16.msra.mxu0 0
      %414 = vmatprep.mubr.bf16.mxu0 0
      %415 = vmatmul.mubr.bf16.gmra.mrb[0].mxu0 %v376
      %v416 = vpop.f32.mrb[0].mxu0
      %v417 = vadd.f32 %v363, %v416
      %v418 = vpop.f32.mrb[0].mxu0
      %v419 = vpop.f32.mrb[0].mxu0
      %v420 = vadd.f32 %v366, %v419
      %v421 = vpop.f32.mrb[0].mxu0
      %422 = vdwg.mxu0
      %v423 = vlaneseq
      %v424 = vshrl.u32 %v423, 7
      %v425 = vsub.s32 0, %v424
      %v426 = vrot.slane %v305, %v425
      %v427 = vadd.f32 %v417, %v426
      %v428 = vadd.f32 %v420, %v426
      %v429 = vmax.f32 %v427, 0.0
      %v430 = vmax.f32 %v428, 0.0
      %v431 = vpack.c.bf16 %v430, %v429
      %v432 = vld [vmem:[%s4] sm:$0xf]
      %v433 = vld [vmem:[%s4 + $0x4] sm:$0xf]
      %v434 = vld [vmem:[%s4 + $0x8] sm:$0xf]
      %v435 = vld [vmem:[%s4 + $0xc] sm:$0xf]
      %v436 = vld [vmem:[%s4 + $0x10] sm:$0xf]
      %v437 = vld [vmem:[%s4 + $0x14] sm:$0xf]
      %v438 = vld [vmem:[%s4 + $0x18] sm:$0xf]
      %v439 = vld [vmem:[%s4 + $0x1c] sm:$0xf]
      %v440 = vlaneseq
      %v441 = vshrl.u32 %v440, 7
      %v442 = vsub.s32 0, %v441
      %v443 = vrot.slane %v306, %v442
      %v452 = vunpack.c.l.b16 %v432
      %v453 = vunpack.c.l.b16 %v433
      %v454 = vunpack.c.l.b16 %v434
      %v455 = vunpack.c.l.b16 %v435
      %v456 = vunpack.c.l.b16 %v436
      %v457 = vunpack.c.l.b16 %v437
      %v458 = vunpack.c.l.b16 %v438
      %v459 = vunpack.c.l.b16 %v439
      %v460 = vpack.c.b16 %v453, %v452
      %v461 = vpack.c.b16 %v455, %v454
      %v462 = vpack.c.b16 %v457, %v456
      %v463 = vpack.c.b16 %v459, %v458
      %vm468 = vcmask 523264
      %v470 = vsel %vm468, %v431, 0
      %472 = vmatprep.subr.bf16.mxu0 0
      %473 = vmatpush1.bf16.msra.mxu0 %v460
      %474 = vmatprep.subr.bf16.mxu0 0
      %475 = vmatpush1.bf16.msra.mxu0 %v461
      %476 = vmatprep.subr.bf16.mxu0 0
      %477 = vmatpush1.bf16.msra.mxu0 %v462
      %478 = vmatprep.subr.bf16.mxu0 0
      %479 = vmatpush1.bf16.msra.mxu0 %v463
      %480 = vmatprep.subr.bf16.mxu0 0
      %481 = vmatpush1.bf16.msra.mxu0 0
      %482 = vmatprep.subr.bf16.mxu0 0
      %483 = vmatpush1.bf16.msra.mxu0 0
      %484 = vmatprep.subr.bf16.mxu0 0
      %485 = vmatpush1.bf16.msra.mxu0 0
      %486 = vmatprep.subr.bf16.mxu0 0
      %487 = vmatpush1.bf16.msra.mxu0 0
      %488 = vmatprep.subr.bf16.mxu0 0
      %489 = vmatpush1.bf16.msra.mxu0 0
      %490 = vmatprep.subr.bf16.mxu0 0
      %491 = vmatpush1.bf16.msra.mxu0 0
      %492 = vmatprep.subr.bf16.mxu0 0
      %493 = vmatpush1.bf16.msra.mxu0 0
      %494 = vmatprep.subr.bf16.mxu0 0
      %495 = vmatpush1.bf16.msra.mxu0 0
      %496 = vmatprep.subr.bf16.mxu0 0
      %497 = vmatpush1.bf16.msra.mxu0 0
      %498 = vmatprep.subr.bf16.mxu0 0
      %499 = vmatpush1.bf16.msra.mxu0 0
      %500 = vmatprep.subr.bf16.mxu0 0
      %501 = vmatpush1.bf16.msra.mxu0 0
      %502 = vmatprep.subr.bf16.mxu0 0
      %503 = vmatpush1.bf16.msra.mxu0 0
      %504 = vmatprep.mubr.bf16.mxu0 0
      %505 = vmatmul.mubr.bf16.gmra.mrb[0].mxu0 %v470
      %v506 = vpop.f32.mrb[0].mxu0
      %v507 = vadd.f32 %v443, %v506
      %v508 = vpop.f32.mrb[0].mxu0
      %v509 = vpop.f32.mrb[0].mxu0
      %v510 = vadd.f32 %v443, %v509
      %v511 = vpop.f32.mrb[0].mxu0
      %512 = vdwg.mxu0
      %v513 = vlaneseq
      %v514 = vshrl.u32 %v513, 7
      %v515 = vsub.s32 0, %v514
      %v516 = vrot.slane %v309, %v515
      %v517 = vmul.f32 %v507, %v516
      %v518 = vmul.f32 %v510, %v516
      %v519 = vlaneseq
      %v520 = vshrl.u32 %v519, 7
      %v521 = vsub.s32 0, %v520
      %v522 = vrot.slane %v310, %v521
      %v523 = vadd.f32 %v517, %v522
      %v524 = vadd.f32 %v518, %v522
      %v525 = vmax.f32 %v523, 0.0
      %v526 = vmax.f32 %v524, 0.0
      %v527 = vlaneseq
      %v528 = vshrl.u32 %v527, 7
      %v529 = vsub.s32 0, %v528
      %v530 = vrot.slane %v307, %v529
      %v531 = vmul.f32 %v525, %v530
      %v532 = vmul.f32 %v526, %v530
      %v533 = vsel %vm468, %v531, 0.0
      %534 = vadd.xlane.f32.xlu0 %v533
      %v535 = vpop.xlane.xlu0 %534
      %v536 = vsel %vm468, %v532, 0.0
      %537 = vadd.xlane.f32.xlu0 %v536
      %v538 = vpop.xlane.xlu0 %537
      %v539 = vlaneseq
      %v540 = vshrl.u32 %v539, 7
      %v541 = vsub.s32 0, %v540
      %v542 = vrot.slane %v308, %v541
      %v543 = vadd.f32 %v535, %v542
      %v544 = vadd.f32 %v538, %v542
      %vm545 = vcmask 7168
      %546 = vst.msk [vmem:[%s302] sm:$0xff] %vm545, %v543
      %547 = vst.msk [vmem:[%s302 + $0x8] sm:$0xff] %vm545, %v544
      %s548 = smul.u32 2, %s18
      %p549 = scmp.lt.s32.totalorder %s548, 7
      %s550 = scalar_select %p549, %s548, 7
      %s551 = smul.addr %s550, 8
      %s552 = scalar_lea.vmem %s7, %s551
      // Predicated region
      $region49: #{_lambda_.3} parent=47 // pred_check
        %p553 = pneg %p193
      $region50: #{_lambda_.3} parent=47 // pred_check_branch
        %555 = sbr.rel (%p553) target = $region52
      $region51: #{_lambda_.3} parent=47 // pred_region
        %s556 = smul.u32 2, %s18
      $region52: #{_lambda_.3} parent=47 // pred_fallthru
        _
    $region48: #{_lambda_.3} parent=5 // pred_fallthru
      _
    %p557 = scmp.le.s32.totalorder 2, %s13
    // Predicated region
    $region53: #{_lambda_.3} parent=5 // pred_check
      %p558 = pneg %p557
    $region54: #{_lambda_.3} parent=5 // pred_check_branch
      %560 = sbr.rel (%p558) target = $region56
    $region55: #{_lambda_.3} parent=5 // pred_region
      %s561 = ssub.s32 %s13, 2
      // Predicated region
      $region57: #{_lambda_.3} parent=55 // pred_check
        %p562 = pneg %p199
      $region58: #{_lambda_.3} parent=55 // pred_check_branch
        %564 = sbr.rel (%p562) target = $region60
      $region59: #{_lambda_.3} parent=55 // pred_region
        %s565 = smul.u32 2, %s19
        %p566 = scmp.lt.s32.totalorder %s565, 7
        %s567 = scalar_select %p566, %s565, 7
        %s568 = smul.addr %s567, 8
        %s569 = scalar_lea.vmem %s7, %s568
      $region60: #{_lambda_.3} parent=55 // pred_fallthru
        _
    $region56: #{_lambda_.3} parent=5 // pred_fallthru
      _
  $region6: #{_lambda_.3} parent=0 // loop_footer
    %s17 = sadd.s32 1, %s13
  $region7: #{_lambda_.3} parent=0 // loop_footer_branch
    %12 = sbr.rel target = $region3
  $region8: #{_lambda_.3} parent=0 // loop_exit
    _

// kernel: _lambda_.2
$region0: #{_lambda_.2}
  #allocation0 [shape = 'u32[]', space=smem, size = 0x4, offset = 0x4, fixed_abs, tag = 'smem constant byte address 0x4 - core index']
  #allocation1 [shape = 'u32[144,128]{1,0:T(1,128)}', space=vmem, size = 0x12000, scoped, tag = 'internal scratch']
  %s0 = inlined_call_operand.vmem [shape: f32[64,12], index: 0, kind: input, shape index: {}]
  %s1 = inlined_call_operand.vmem [shape: f32[64,6], index: 1, kind: input, shape index: {}]
  %s2 = inlined_call_operand.vmem [shape: bf16[12,64], index: 2, kind: input, shape index: {}]
  %s3 = inlined_call_operand.vmem [shape: bf16[6,64], index: 3, kind: input, shape index: {}]
  %s4 = inlined_call_operand.vmem [shape: bf16[64,64], index: 4, kind: input, shape index: {}]
  %s5 = inlined_call_operand.vmem [shape: f32[8,64], index: 5, kind: input, shape index: {}]
  %s6 = inlined_call_operand.vmem [shape: f32[4,2,64], index: 6, kind: output, shape index: {}]
  %s7 = sld [smem:[#allocation0]]
  $region57: #{_lambda_.2} parent=0
    _
  %s9 = ssub.s32 1, %s7
  %s10 = scalar_select 0, %s9, %s7
  loop: start=0, step=1, limit=6
  $region2: #{_lambda_.2} parent=0 // loop_pre_header
    _
  $region3: #{_lambda_.2} parent=0 // loop_header
    %s12 = sphi 0, %s16
    %p13 = scmp.ge.s32.totalorder %s12, 6
    %s22 = sphi 0, %s24
    %s25 = sphi 0, %s22
    %s26 = sphi 0, %s25
    %s42 = sphi 0, %s26
    %s48 = sphi 0, %s50
    %s51 = sphi 0, %s48
    %s52 = sphi 0, %s51
    %s68 = sphi 0, %s52
    %s72 = sphi 0, %s72
    %s74 = sphi 0, %s72
    %s75 = sphi 0, %s74
    %s89 = sphi 0, %s75
    %s93 = sphi 0, %s93
    %s95 = sphi 0, %s93
    %s96 = sphi 0, %s95
    %s110 = sphi 0, %s96
    %s114 = sphi 0, %s114
    %s116 = sphi 0, %s114
    %s117 = sphi 0, %s116
    %s131 = sphi 0, %s117
    %s135 = sphi 0, %s135
    %s137 = sphi 0, %s135
    %s138 = sphi 0, %s137
    %s152 = sphi 0, %s138
    %s158 = sphi 0, %s160
    %s161 = sphi 0, %s158
    %s162 = sphi 0, %s161
    %s178 = sphi 0, %s162
  $region4: #{_lambda_.2} parent=0 // loop_header_branch
    %15 = sbr.rel (%p13) target = $region8
  $region5: #{_lambda_.2} parent=0 // loop_body
    %s17 = ssub.s32 %s12, 1
    %s18 = ssub.s32 %s12, 2
    %s19 = sadd.s32 %s12, 1
    %s20 = ssub.s32 %s12, %s19
    %p21 = scmp.eq.s32.totalorder %s20, 0
    %s23 = sadd.s32 %s22, 1
    %s24 = scalar_select %p21, %s22, %s23
    %p27 = pneg %p21
    %p28 = scmp.eq.s32.totalorder %s12, 3
    %p29 = por %p27, %p28
    %p30 = scmp.ne.s32.totalorder %s22, %s25
    %p31 = scmp.eq.s32.totalorder %s12, 0
    %p32 = por %p30, %p31
    %p33 = scmp.ne.s32.totalorder %s22, %s25
    %p34 = scmp.eq.s32.totalorder %s17, 3
    %p35 = por %p33, %p34
    %p36 = scmp.ne.s32.totalorder %s25, %s26
    %p37 = scmp.eq.s32.totalorder %s17, 0
    %p38 = por %p36, %p37
    %p39 = scmp.ne.s32.totalorder %s25, %s26
    %p40 = scmp.eq.s32.totalorder %s18, 3
    %p41 = por %p39, %p40
    %p43 = scmp.ne.s32.totalorder %s26, %s42
    %p44 = scmp.eq.s32.totalorder %s18, 0
    %p45 = por %p43, %p44
    %s46 = ssub.s32 %s12, %s19
    %p47 = scmp.eq.s32.totalorder %s46, 0
    %s49 = sadd.s32 %s48, 1
    %s50 = scalar_select %p47, %s48, %s49
    %p53 = pneg %p47
    %p54 = scmp.eq.s32.totalorder %s12, 3
    %p55 = por %p53, %p54
    %p56 = scmp.ne.s32.totalorder %s48, %s51
    %p57 = scmp.eq.s32.totalorder %s12, 0
    %p58 = por %p56, %p57
    %p59 = scmp.ne.s32.totalorder %s48, %s51
    %p60 = scmp.eq.s32.totalorder %s17, 3
    %p61 = por %p59, %p60
    %p62 = scmp.ne.s32.totalorder %s51, %s52
    %p63 = scmp.eq.s32.totalorder %s17, 0
    %p64 = por %p62, %p63
    %p65 = scmp.ne.s32.totalorder %s51, %s52
    %p66 = scmp.eq.s32.totalorder %s18, 3
    %p67 = por %p65, %p66
    %p69 = scmp.ne.s32.totalorder %s52, %s68
    %p70 = scmp.eq.s32.totalorder %s18, 0
    %p71 = por %p69, %p70
    %s73 = sadd.s32 %s72, 1
    %p76 = scmp.eq.s32.totalorder %s12, 3
    %p77 = scmp.ne.s32.totalorder %s72, %s74
    %p78 = scmp.eq.s32.totalorder %s12, 0
    %p79 = por %p77, %p78
    %p80 = scmp.ne.s32.totalorder %s72, %s74
    %p81 = scmp.eq.s32.totalorder %s17, 3
    %p82 = por %p80, %p81
    %p83 = scmp.ne.s32.totalorder %s74, %s75
    %p84 = scmp.eq.s32.totalorder %s17, 0
    %p85 = por %p83, %p84
    %p86 = scmp.ne.s32.totalorder %s74, %s75
    %p87 = scmp.eq.s32.totalorder %s18, 3
    %p88 = por %p86, %p87
    %p90 = scmp.ne.s32.totalorder %s75, %s89
    %p91 = scmp.eq.s32.totalorder %s18, 0
    %p92 = por %p90, %p91
    %s94 = sadd.s32 %s93, 1
    %p97 = scmp.eq.s32.totalorder %s12, 3
    %p98 = scmp.ne.s32.totalorder %s93, %s95
    %p99 = scmp.eq.s32.totalorder %s12, 0
    %p100 = por %p98, %p99
    %p101 = scmp.ne.s32.totalorder %s93, %s95
    %p102 = scmp.eq.s32.totalorder %s17, 3
    %p103 = por %p101, %p102
    %p104 = scmp.ne.s32.totalorder %s95, %s96
    %p105 = scmp.eq.s32.totalorder %s17, 0
    %p106 = por %p104, %p105
    %p107 = scmp.ne.s32.totalorder %s95, %s96
    %p108 = scmp.eq.s32.totalorder %s18, 3
    %p109 = por %p107, %p108
    %p111 = scmp.ne.s32.totalorder %s96, %s110
    %p112 = scmp.eq.s32.totalorder %s18, 0
    %p113 = por %p111, %p112
    %s115 = sadd.s32 %s114, 1
    %p118 = scmp.eq.s32.totalorder %s12, 3
    %p119 = scmp.ne.s32.totalorder %s114, %s116
    %p120 = scmp.eq.s32.totalorder %s12, 0
    %p121 = por %p119, %p120
    %p122 = scmp.ne.s32.totalorder %s114, %s116
    %p123 = scmp.eq.s32.totalorder %s17, 3
    %p124 = por %p122, %p123
    %p125 = scmp.ne.s32.totalorder %s116, %s117
    %p126 = scmp.eq.s32.totalorder %s17, 0
    %p127 = por %p125, %p126
    %p128 = scmp.ne.s32.totalorder %s116, %s117
    %p129 = scmp.eq.s32.totalorder %s18, 3
    %p130 = por %p128, %p129
    %p132 = scmp.ne.s32.totalorder %s117, %s131
    %p133 = scmp.eq.s32.totalorder %s18, 0
    %p134 = por %p132, %p133
    %s136 = sadd.s32 %s135, 1
    %p139 = scmp.eq.s32.totalorder %s12, 3
    %p140 = scmp.ne.s32.totalorder %s135, %s137
    %p141 = scmp.eq.s32.totalorder %s12, 0
    %p142 = por %p140, %p141
    %p143 = scmp.ne.s32.totalorder %s135, %s137
    %p144 = scmp.eq.s32.totalorder %s17, 3
    %p145 = por %p143, %p144
    %p146 = scmp.ne.s32.totalorder %s137, %s138
    %p147 = scmp.eq.s32.totalorder %s17, 0
    %p148 = por %p146, %p147
    %p149 = scmp.ne.s32.totalorder %s137, %s138
    %p150 = scmp.eq.s32.totalorder %s18, 3
    %p151 = por %p149, %p150
    %p153 = scmp.ne.s32.totalorder %s138, %s152
    %p154 = scmp.eq.s32.totalorder %s18, 0
    %p155 = por %p153, %p154
    %s156 = ssub.s32 %s12, %s19
    %p157 = scmp.eq.s32.totalorder %s156, 0
    %s159 = sadd.s32 %s158, 1
    %s160 = scalar_select %p157, %s158, %s159
    %p163 = pneg %p157
    %p164 = scmp.eq.s32.totalorder %s12, 3
    %p165 = por %p163, %p164
    %p166 = scmp.ne.s32.totalorder %s158, %s161
    %p167 = scmp.eq.s32.totalorder %s12, 0
    %p168 = por %p166, %p167
    %p169 = scmp.ne.s32.totalorder %s158, %s161
    %p170 = scmp.eq.s32.totalorder %s17, 3
    %p171 = por %p169, %p170
    %p172 = scmp.ne.s32.totalorder %s161, %s162
    %p173 = scmp.eq.s32.totalorder %s17, 0
    %p174 = por %p172, %p173
    %p175 = scmp.ne.s32.totalorder %s161, %s162
    %p176 = scmp.eq.s32.totalorder %s18, 3
    %p177 = por %p175, %p176
    %p179 = scmp.ne.s32.totalorder %s162, %s178
    %p180 = scmp.eq.s32.totalorder %s18, 0
    %p181 = por %p179, %p180
    %p182 = scmp.le.s32.totalorder 1, %s12
    %p183 = scmp.lt.s32.totalorder %s12, 5
    %p184 = pnand %p182, %p183
    %p185 = pneg %p184
    // Predicated region
    $region9: #{_lambda_.2} parent=5 // pred_check
      _
    $region10: #{_lambda_.2} parent=5 // pred_check_branch
      %187 = sbr.rel (%p184) target = $region12
    $region11: #{_lambda_.2} parent=5 // pred_region
      %s188 = ssub.s32 %s12, 1
      // Predicated region
      $region13: #{_lambda_.2} parent=11 // pred_check
        %p189 = pneg %p85
      $region14: #{_lambda_.2} parent=11 // pred_check_branch
        %191 = sbr.rel (%p189) target = $region16
      $region15: #{_lambda_.2} parent=11 // pred_region
        _
      $region16: #{_lambda_.2} parent=11 // pred_fallthru
        _
      // Predicated region
      $region17: #{_lambda_.2} parent=11 // pred_check
        %p192 = pneg %p106
      $region18: #{_lambda_.2} parent=11 // pred_check_branch
        %194 = sbr.rel (%p192) target = $region20
      $region19: #{_lambda_.2} parent=11 // pred_region
        _
      $region20: #{_lambda_.2} parent=11 // pred_fallthru
        _
      // Predicated region
      $region21: #{_lambda_.2} parent=11 // pred_check
        %p195 = pneg %p127
      $region22: #{_lambda_.2} parent=11 // pred_check_branch
        %197 = sbr.rel (%p195) target = $region24
      $region23: #{_lambda_.2} parent=11 // pred_region
        _
      $region24: #{_lambda_.2} parent=11 // pred_fallthru
        _
      // Predicated region
      $region25: #{_lambda_.2} parent=11 // pred_check
        %p198 = pneg %p148
      $region26: #{_lambda_.2} parent=11 // pred_check_branch
        %200 = sbr.rel (%p198) target = $region28
      $region27: #{_lambda_.2} parent=11 // pred_region
        _
      $region28: #{_lambda_.2} parent=11 // pred_fallthru
        _
    $region12: #{_lambda_.2} parent=5 // pred_fallthru
      _
    %p201 = scmp.lt.s32.totalorder %s12, 4
    // Predicated region
    $region29: #{_lambda_.2} parent=5 // pred_check
      %p202 = pneg %p201
    $region30: #{_lambda_.2} parent=5 // pred_check_branch
      %204 = sbr.rel (%p202) target = $region32
    $region31: #{_lambda_.2} parent=5 // pred_region
      // Predicated region
      $region33: #{_lambda_.2} parent=31 // pred_check
        %p205 = pneg %p32
      $region34: #{_lambda_.2} parent=31 // pred_check_branch
        %207 = sbr.rel (%p205) target = $region36
      $region35: #{_lambda_.2} parent=31 // pred_region
        %s208 = smul.u32 2, %s12
        %p209 = scmp.lt.s32.totalorder %s208, 7
        %s210 = scalar_select %p209, %s208, 7
        %s211 = smul.addr %s210, 8
        %s212 = scalar_lea.vmem %s0, %s211
        %s213 = smul.u32 2, %s12
      $region36: #{_lambda_.2} parent=31 // pred_fallthru
        _
      // Predicated region
      $region37: #{_lambda_.2} parent=31 // pred_check
        %p214 = pneg %p58
      $region38: #{_lambda_.2} parent=31 // pred_check_branch
        %216 = sbr.rel (%p214) target = $region40
      $region39: #{_lambda_.2} parent=31 // pred_region
        %s217 = smul.u32 2, %s12
        %p218 = scmp.lt.s32.totalorder %s217, 7
        %s219 = scalar_select %p218, %s217, 7
        %s220 = smul.addr %s219, 8
        %s221 = scalar_lea.vmem %s1, %s220
        %s222 = smul.u32 2, %s12
      $region40: #{_lambda_.2} parent=31 // pred_fallthru
        _
    $region32: #{_lambda_.2} parent=5 // pred_fallthru
      _
    %p223 = scmp.le.s32.totalorder 1, %s12
    %p224 = scmp.lt.s32.totalorder %s12, 5
    %p225 = pnand %p223, %p224
    %p226 = pneg %p225
    // Predicated region
    $region41: #{_lambda_.2} parent=5 // pred_check
      _
    $region42: #{_lambda_.2} parent=5 // pred_check_branch
      %228 = sbr.rel (%p225) target = $region44
    $region43: #{_lambda_.2} parent=5 // pred_region
      %s229 = ssub.s32 %s12, 1
      %s230 = smul.u32 2, %s17
      %p231 = scmp.lt.s32.totalorder %s230, 7
      %s232 = scalar_select %p231, %s230, 7
      %s233 = smul.addr %s232, 8
      %s234 = scalar_lea.vmem %s0, %s233
      %p235 = pneg %p38
      %p236 = pneg %p35
      %s237 = smul.u32 2, %s17
      %p238 = scmp.lt.s32.totalorder %s237, 7
      %s239 = scalar_select %p238, %s237, 7
      %s240 = smul.addr %s239, 8
      %s241 = scalar_lea.vmem %s1, %s240
      %p242 = pneg %p64
      %p243 = pneg %p61
      %p244 = pneg %p85
      %p245 = pneg %p82
      %p246 = pneg %p106
      %p247 = pneg %p103
      %p248 = pneg %p127
      %p249 = pneg %p124
      %p250 = pneg %p148
      %p251 = pneg %p145
      %p252 = pneg %p174
      %p253 = pneg %p171
      %p254 = scmp.lt.s32.totalorder %s17, 3
      %s255 = scalar_select %p254, %s17, 3
      %s256 = smul.addr %s255, 2
      %s257 = scalar_lea.vmem %s6, %s256
      %s258 = smul.u32 2, %s17
      %p259 = scmp.lt.s32.totalorder %s258, 7
      %s260 = scalar_select %p259, %s258, 7
      %s261 = smul.addr %s260, 8
      %s262 = scalar_lea.vmem %s0, %s261
      %s263 = smul.u32 2, %s17
      %s264 = smul.u32 2, %s17
      %p265 = scmp.lt.s32.totalorder %s264, 7
      %s266 = scalar_select %p265, %s264, 7
      %s267 = smul.addr %s266, 8
      %s268 = scalar_lea.vmem %s1, %s267
      %s269 = smul.u32 2, %s17
      %p270 = scmp.lt.s32.totalorder %s17, 3
      %s271 = scalar_select %p270, %s17, 3
      %s272 = smul.addr %s271, 2
      %s273 = scalar_lea.vmem %s6, %s272
      %v275 = vld [vmem:[%s5] sm:$0x1]
      %v276 = vld [vmem:[%s5 + $0x1] sm:$0x1]
      %v277 = vld [vmem:[%s262] sm:$0xff]
      %v278 = vld [vmem:[%s262 + $0x8] sm:$0xff]
      %v279 = vpack.c.bf16 %v278, %v277
      %v280 = vld [vmem:[%s2] sm:$0xf]
      %v281 = vld [vmem:[%s2 + $0x4] sm:$0x3]
      %v282 = vld [vmem:[%s268] sm:$0xff]
      %v283 = vld [vmem:[%s268 + $0x8] sm:$0xff]
      %v284 = vpack.c.bf16 %v283, %v282
      %v285 = vld [vmem:[%s3] sm:$0x7]
      %vm286 = vcmask 48128
      %v288 = vsel %vm286, %v284, 0
      %vm290 = vcmask 1042432
      %v292 = vsel %vm290, %v285, 0
      %294 = vmatprep.subr.bf16.mxu0 0
      %295 = vmatpush1.bf16.msra.mxu0 %v292
      %296 = vmatprep.subr.bf16.mxu0 0
      %297 = vmatpush1.bf16.msra.mxu0 0
      %298 = vmatprep.subr.bf16.mxu0 0
      %299 = vmatpush1.bf16.msra.mxu0 0
      %300 = vmatprep.subr.bf16.mxu0 0
      %301 = vmatpush1.bf16.msra.mxu0 0
      %302 = vmatprep.subr.bf16.mxu0 0
      %303 = vmatpush1.bf16.msra.mxu0 0
      %304 = vmatprep.subr.bf16.mxu0 0
      %305 = vmatpush1.bf16.msra.mxu0 0
      %306 = vmatprep.subr.bf16.mxu0 0
      %307 = vmatpush1.bf16.msra.mxu0 0
      %308 = vmatprep.subr.bf16.mxu0 0
      %309 = vmatpush1.bf16.msra.mxu0 0
      %310 = vmatprep.subr.bf16.mxu0 0
      %311 = vmatpush1.bf16.msra.mxu0 0
      %312 = vmatprep.subr.bf16.mxu0 0
      %313 = vmatpush1.bf16.msra.mxu0 0
      %314 = vmatprep.subr.bf16.mxu0 0
      %315 = vmatpush1.bf16.msra.mxu0 0
      %316 = vmatprep.subr.bf16.mxu0 0
      %317 = vmatpush1.bf16.msra.mxu0 0
      %318 = vmatprep.subr.bf16.mxu0 0
      %319 = vmatpush1.bf16.msra.mxu0 0
      %320 = vmatprep.subr.bf16.mxu0 0
      %321 = vmatpush1.bf16.msra.mxu0 0
      %322 = vmatprep.subr.bf16.mxu0 0
      %323 = vmatpush1.bf16.msra.mxu0 0
      %324 = vmatprep.subr.bf16.mxu0 0
      %325 = vmatpush1.bf16.msra.mxu0 0
      %326 = vmatprep.mubr.bf16.mxu0 0
      %327 = vmatmul.mubr.bf16.gmra.mrb[0].mxu0 %v288
      %v328 = vpop.f32.mrb[0].mxu0
      %v329 = vadd.f32 0.0, %v328
      %v330 = vpop.f32.mrb[0].mxu0
      %v331 = vpop.f32.mrb[0].mxu0
      %v332 = vadd.f32 0.0, %v331
      %v333 = vpop.f32.mrb[0].mxu0
      %334 = vdwg.mxu0
      %v337 = vunpack.c.l.b16 %v280
      %v338 = vunpack.c.l.b16 %v281
      %v339 = vpack.c.b16 %v338, %v337
      %vm340 = vcmask 97280
      %v342 = vsel %vm340, %v279, 0
      %vm344 = vcmask 1045504
      %v346 = vsel %vm344, %v339, 0
      %348 = vmatprep.subr.bf16.mxu0 0
      %349 = vmatpush1.bf16.msra.mxu0 %v346
      %350 = vmatprep.subr.bf16.mxu0 0
      %351 = vmatpush1.bf16.msra.mxu0 0
      %352 = vmatprep.subr.bf16.mxu0 0
      %353 = vmatpush1.bf16.msra.mxu0 0
      %354 = vmatprep.subr.bf16.mxu0 0
      %355 = vmatpush1.bf16.msra.mxu0 0
      %356 = vmatprep.subr.bf16.mxu0 0
      %357 = vmatpush1.bf16.msra.mxu0 0
      %358 = vmatprep.subr.bf16.mxu0 0
      %359 = vmatpush1.bf16.msra.mxu0 0
      %360 = vmatprep.subr.bf16.mxu0 0
      %361 = vmatpush1.bf16.msra.mxu0 0
      %362 = vmatprep.subr.bf16.mxu0 0
      %363 = vmatpush1.bf16.msra.mxu0 0
      %364 = vmatprep.subr.bf16.mxu0 0
      %365 = vmatpush1.bf16.msra.mxu0 0
      %366 = vmatprep.subr.bf16.mxu0 0
      %367 = vmatpush1.bf16.msra.mxu0 0
      %368 = vmatprep.subr.bf16.mxu0 0
      %369 = vmatpush1.bf16.msra.mxu0 0
      %370 = vmatprep.subr.bf16.mxu0 0
      %371 = vmatpush1.bf16.msra.mxu0 0
      %372 = vmatprep.subr.bf16.mxu0 0
      %373 = vmatpush1.bf16.msra.mxu0 0
      %374 = vmatprep.subr.bf16.mxu0 0
      %375 = vmatpush1.bf16.msra.mxu0 0
      %376 = vmatprep.subr.bf16.mxu0 0
      %377 = vmatpush1.bf16.msra.mxu0 0
      %378 = vmatprep.subr.bf16.mxu0 0
      %379 = vmatpush1.bf16.msra.mxu0 0
      %380 = vmatprep.mubr.bf16.mxu0 0
      %381 = vmatmul.mubr.bf16.gmra.mrb[0].mxu0 %v342
      %v382 = vpop.f32.mrb[0].mxu0
      %v383 = vadd.f32 %v329, %v382
      %v384 = vpop.f32.mrb[0].mxu0
      %v385 = vpop.f32.mrb[0].mxu0
      %v386 = vadd.f32 %v332, %v385
      %v387 = vpop.f32.mrb[0].mxu0
      %388 = vdwg.mxu0
      %v389 = vlaneseq
      %v390 = vshrl.u32 %v389, 7
      %v391 = vsub.s32 0, %v390
      %v392 = vrot.slane %v275, %v391
      %v393 = vadd.f32 %v383, %v392
      %v394 = vadd.f32 %v386, %v392
      %v395 = vmax.f32 %v393, 0.0
      %v396 = vmax.f32 %v394, 0.0
      %v397 = vpack.c.bf16 %v396, %v395
      %v398 = vld [vmem:[%s4] sm:$0xf]
      %v399 = vld [vmem:[%s4 + $0x4] sm:$0xf]
      %v400 = vld [vmem:[%s4 + $0x8] sm:$0xf]
      %v401 = vld [vmem:[%s4 + $0xc] sm:$0xf]
      %v402 = vld [vmem:[%s4 + $0x10] sm:$0xf]
      %v403 = vld [vmem:[%s4 + $0x14] sm:$0xf]
      %v404 = vld [vmem:[%s4 + $0x18] sm:$0xf]
      %v405 = vld [vmem:[%s4 + $0x1c] sm:$0xf]
      %v406 = vlaneseq
      %v407 = vshrl.u32 %v406, 7
      %v408 = vsub.s32 0, %v407
      %v409 = vrot.slane %v276, %v408
      %v418 = vunpack.c.l.b16 %v398
      %v419 = vunpack.c.l.b16 %v399
      %v420 = vunpack.c.l.b16 %v400
      %v421 = vunpack.c.l.b16 %v401
      %v422 = vunpack.c.l.b16 %v402
      %v423 = vunpack.c.l.b16 %v403
      %v424 = vunpack.c.l.b16 %v404
      %v425 = vunpack.c.l.b16 %v405
      %v426 = vpack.c.b16 %v419, %v418
      %v427 = vpack.c.b16 %v421, %v420
      %v428 = vpack.c.b16 %v423, %v422
      %v429 = vpack.c.b16 %v425, %v424
      %vm434 = vcmask 523264
      %v436 = vsel %vm434, %v397, 0
      %438 = vmatprep.subr.bf16.mxu0 0
      %439 = vmatpush1.bf16.msra.mxu0 %v426
      %440 = vmatprep.subr.bf16.mxu0 0
      %441 = vmatpush1.bf16.msra.mxu0 %v427
      %442 = vmatprep.subr.bf16.mxu0 0
      %443 = vmatpush1.bf16.msra.mxu0 %v428
      %444 = vmatprep.subr.bf16.mxu0 0
      %445 = vmatpush1.bf16.msra.mxu0 %v429
      %446 = vmatprep.subr.bf16.mxu0 0
      %447 = vmatpush1.bf16.msra.mxu0 0
      %448 = vmatprep.subr.bf16.mxu0 0
      %449 = vmatpush1.bf16.msra.mxu0 0
      %450 = vmatprep.subr.bf16.mxu0 0
      %451 = vmatpush1.bf16.msra.mxu0 0
      %452 = vmatprep.subr.bf16.mxu0 0
      %453 = vmatpush1.bf16.msra.mxu0 0
      %454 = vmatprep.subr.bf16.mxu0 0
      %455 = vmatpush1.bf16.msra.mxu0 0
      %456 = vmatprep.subr.bf16.mxu0 0
      %457 = vmatpush1.bf16.msra.mxu0 0
      %458 = vmatprep.subr.bf16.mxu0 0
      %459 = vmatpush1.bf16.msra.mxu0 0
      %460 = vmatprep.subr.bf16.mxu0 0
      %461 = vmatpush1.bf16.msra.mxu0 0
      %462 = vmatprep.subr.bf16.mxu0 0
      %463 = vmatpush1.bf16.msra.mxu0 0
      %464 = vmatprep.subr.bf16.mxu0 0
      %465 = vmatpush1.bf16.msra.mxu0 0
      %466 = vmatprep.subr.bf16.mxu0 0
      %467 = vmatpush1.bf16.msra.mxu0 0
      %468 = vmatprep.subr.bf16.mxu0 0
      %469 = vmatpush1.bf16.msra.mxu0 0
      %470 = vmatprep.mubr.bf16.mxu0 0
      %471 = vmatmul.mubr.bf16.gmra.mrb[0].mxu0 %v436
      %v472 = vpop.f32.mrb[0].mxu0
      %v473 = vadd.f32 %v409, %v472
      %v474 = vpop.f32.mrb[0].mxu0
      %v475 = vpop.f32.mrb[0].mxu0
      %v476 = vadd.f32 %v409, %v475
      %v477 = vpop.f32.mrb[0].mxu0
      %478 = vdwg.mxu0
      %s479 = smul.u32 %s17, 16
      %v480 = vlaneseq
      %v481 = vshrl.u32 %v480, 7
      %v482 = vadd.s32 %v481, 8
      %v483 = vstv %s479
      %v484 = vadd.s32 %v483, %v481
      %v485 = vadd.s32 %v483, %v482
      %vm486 = vcmp.lt.s32.totalorder %v484, 60
      %vm487 = vcmp.lt.s32.totalorder %v485, 60
      %v488 = vsel %vm486, 1, 0
      %v489 = vsel %vm487, 1, 0
      %vm490 = vcmp.eq.s32.totalorder %v488, 1
      %vm491 = vcmp.eq.s32.totalorder %v489, 1
      %v492 = vsel %vm490, %v473, 0.0
      %v493 = vsel %vm491, %v476, 0.0
      %v494 = vsel %vm434, %v492, 0.0
      %v495 = vsel %vm434, %v493, 0.0
      %v496 = vadd.f32 %v494, %v495
      %v497 = vrot.slane %v496, 4
      %v498 = vadd.f32 %v496, %v497
      %v499 = vrot.slane %v498, 2
      %v500 = vadd.f32 %v498, %v499
      %v501 = vrot.slane %v500, 1
      %v502 = vadd.f32 %v500, %v501
      %v503 = vmul.f32 %v492, %v492
      %v504 = vmul.f32 %v493, %v493
      %v505 = vsel %vm434, %v503, 0.0
      %v506 = vsel %vm434, %v504, 0.0
      %v507 = vadd.f32 %v505, %v506
      %v508 = vrot.slane %v507, 4
      %v509 = vadd.f32 %v507, %v508
      %v510 = vrot.slane %v509, 2
      %v511 = vadd.f32 %v509, %v510
      %v512 = vrot.slane %v511, 1
      %v513 = vadd.f32 %v511, %v512
      %vm514 = vcmask 1040384
      %v515 = vsel %vm514, %v502, %v513
      %vm516 = vcmask 517120
      %517 = vst.msk [vmem:[%s273] sm:$0x3] %vm516, %v515
      %p518 = scmp.lt.s32.totalorder %s17, 3
      %s519 = scalar_select %p518, %s17, 3
      %s520 = smul.addr %s519, 2
      %s521 = scalar_lea.vmem %s6, %s520
      // Predicated region
      $region45: #{_lambda_.2} parent=43 // pred_check
        %p522 = pneg %p171
      $region46: #{_lambda_.2} parent=43 // pred_check_branch
        %524 = sbr.rel (%p522) target = $region48
      $region47: #{_lambda_.2} parent=43 // pred_region
        _
      $region48: #{_lambda_.2} parent=43 // pred_fallthru
        _
    $region44: #{_lambda_.2} parent=5 // pred_fallthru
      _
    %p525 = scmp.le.s32.totalorder 2, %s12
    // Predicated region
    $region49: #{_lambda_.2} parent=5 // pred_check
      %p526 = pneg %p525
    $region50: #{_lambda_.2} parent=5 // pred_check_branch
      %528 = sbr.rel (%p526) target = $region52
    $region51: #{_lambda_.2} parent=5 // pred_region
      %s529 = ssub.s32 %s12, 2
      // Predicated region
      $region53: #{_lambda_.2} parent=51 // pred_check
        %p530 = pneg %p177
      $region54: #{_lambda_.2} parent=51 // pred_check_branch
        %532 = sbr.rel (%p530) target = $region56
      $region55: #{_lambda_.2} parent=51 // pred_region
        %p533 = scmp.lt.s32.totalorder %s18, 3
        %s534 = scalar_select %p533, %s18, 3
        %s535 = smul.addr %s534, 2
        %s536 = scalar_lea.vmem %s6, %s535
      $region56: #{_lambda_.2} parent=51 // pred_fallthru
        _
    $region52: #{_lambda_.2} parent=5 // pred_fallthru
      _
  $region6: #{_lambda_.2} parent=0 // loop_footer
    %s16 = sadd.s32 1, %s12
  $region7: #{_lambda_.2} parent=0 // loop_footer_branch
    %11 = sbr.rel target = $region3
  $region8: #{_lambda_.2} parent=0 // loop_exit
    _

</llo_original>
